<compile_context>
chip_gen: v7x
topology: tpu7x:2x2x1
jax: 0.10.0
libtpu: 0.0.40
codegen_flags: <defaults>
</compile_context>

<pallas_src>
import functools

import jax
import jax.numpy as jnp
from jax.experimental import pallas as pl
from jax.experimental.pallas import tpu as pltpu


# ----------------------------------------------------------------------------
# Fused Pallas kernel
# ----------------------------------------------------------------------------
def _attention(wh, a12, mask, alpha, elu):
    """One GatLayer attention given pre-projected features wh = (N, F)."""
    # Merged a1/a2 dot: c[:, 0:1] == Wh@a1, c[:, 1:2] == Wh@a2.
    c = jnp.dot(wh, a12, preferred_element_type=jnp.float32)         # (N, 2)
    # e_ij = c1_i + c2_j.  The (N,1)->(1,N) flip of c2 is a single tiny
    # vreg-internal XLU op; kept (rather than an MXU outer-product broadcast)
    # so the logits stay bit-exact w.r.t. the f32 reference.
    e = c[:, 0:1] + c[:, 1:2].T                                       # (N, N)
    e = jnp.where(e > 0, e, alpha * e)                                # LeakyReLU
    e = e + mask                                                      # -9e15 on non-edges
    # Row softmax (axis=1).  Exact reciprocal kept: approx=True is free on the
    # EUP but would eat into the 1e-4 agreement (review correctness concern).
    e = e - jnp.max(e, axis=1, keepdims=True)
    p = jnp.exp(e)
    att = p * pl.reciprocal(jnp.sum(p, axis=1, keepdims=True), approx=False)
    # TODO(synk): attention dropout omitted (eval-mode semantics).
    hp = jnp.dot(att, wh, preferred_element_type=jnp.float32)         # (N, F)
    if elu:
        # ELU(alpha=1); clamp the exp argument so the dead branch never emits inf.
        hp = jnp.where(hp > 0, hp, jnp.exp(jnp.minimum(hp, 0.0)) - 1.0)
    return hp


def _fused_gat_kernel(x_ref, mask_ref, *refs, alpha, head_num, n_layers, f1):
    # refs = [w0_slab, a12_0[h] * head_num,
    #         (w_d, a12_d) per depth>=1 per head,
    #         w_out, a12_out, lin_w, lin_b, o_ref]
    idx = 0
    w0_slab_ref = refs[idx]; idx += 1
    a12_0_refs = refs[idx:idx + head_num]; idx += head_num
    deep_refs = []
    for _ in range(n_layers - 1):
        per_head = []
        for _ in range(head_num):
            per_head.append((refs[idx], refs[idx + 1]))
            idx += 2
        deep_refs.append(per_head)
    w_out_ref = refs[idx]
    a12_out_ref = refs[idx + 1]
    lin_w_ref = refs[idx + 2]
    lin_b_ref = refs[idx + 3]
    o_ref = refs[idx + 4]

    x = x_ref[...]                                    # (N, F0)
    mask = mask_ref[...].astype(jnp.float32)          # (N, N) additive mask

    # All heads' first-layer projection in one lane-dense MXU push.
    wh_all = jnp.dot(x, w0_slab_ref[...], preferred_element_type=jnp.float32)

    acc = None
    for h in range(head_num):                         # static unroll over heads
        wh = wh_all[:, h * f1:(h + 1) * f1]           # static lane slice
        hx = _attention(wh, a12_0_refs[h][...], mask, alpha, elu=True)
        for per_head in deep_refs:                    # deeper GatLayers, if any
            w_d_ref, a12_d_ref = per_head[h]
            wh_d = jnp.dot(hx, w_d_ref[...], preferred_element_type=jnp.float32)
            hx = _attention(wh_d, a12_d_ref[...], mask, alpha, elu=True)
        acc = hx if acc is None else acc + hx
    hmean = acc * jnp.float32(1.0 / head_num)

    # out_att (concat=False) followed by the final nn.Linear, still in VMEM.
    wh_o = jnp.dot(hmean, w_out_ref[...], preferred_element_type=jnp.float32)
    out = _attention(wh_o, a12_out_ref[...], mask, alpha, elu=False)
    o_ref[...] = (jnp.dot(out, lin_w_ref[...], preferred_element_type=jnp.float32)
                  + lin_b_ref[...])


# ----------------------------------------------------------------------------
# Wrapper: preprocess params once, single fused pallas_call
# ----------------------------------------------------------------------------
def gat_forward(x, params, adj, *, head_num, alpha):
    # F.dropout(..., training=False) -> identity.
    n = x.shape[0]
    heads = params["heads"]
    n_layers = len(heads[0])
    f1 = heads[0][0][0].shape[1]

    # Additive attention mask, computed once and reused by every layer/head.
    # bf16 halves the only O(N^2) input's DMA bytes; 0 / -9e15 survive the cast.
    mask = jnp.where(adj > 0, 0.0, -9e15).astype(jnp.bfloat16)

    # Depth-0 head weights packed lane-dense; a1/a2 merged into (F, 2).
    w0_slab = jnp.concatenate([heads[h][0][0] for h in range(head_num)], axis=1)
    operands = [x, mask, w0_slab]
    for h in range(head_num):
        _, a1, a2 = heads[h][0]
        operands.append(jnp.concatenate([a1, a2], axis=1))            # (F1, 2)
    for d in range(1, n_layers):                                      # deeper layers
        for h in range(head_num):
            w, a1, a2 = heads[h][d]
            operands.append(w)
            operands.append(jnp.concatenate([a1, a2], axis=1))
    w_o, a1_o, a2_o = params["out_att"]
    operands += [w_o, jnp.concatenate([a1_o, a2_o], axis=1),
                 params["lin_w"], params["lin_b"]]

    f_out = params["lin_w"].shape[1]
    kern = functools.partial(_fused_gat_kernel, alpha=alpha, head_num=head_num,
                             n_layers=n_layers, f1=f1)
    # TODO(synk): for large graphs, tile the attention over column blocks with
    # an online softmax (flash-style) and a row-block "parallel" grid axis so
    # v7x's two TensorCores split the work; at N=16 one resident block wins.
    return pl.pallas_call(
        kern,
        out_shape=jax.ShapeDtypeStruct((n, f_out), jnp.float32),
        in_specs=[pl.BlockSpec(memory_space=pltpu.MemorySpace.VMEM)]
        * len(operands),
        out_specs=pl.BlockSpec(memory_space=pltpu.MemorySpace.VMEM),
        compiler_params=pltpu.CompilerParams(
            # Headroom above v5e's 16 MiB default scoped-VMEM for larger N;
            # no-op at these tiny shapes (and <= default on v6e/v7x).
            vmem_limit_bytes=32 * 1024 * 1024),
    )(*operands)


# ----------------------------------------------------------------------------
# Pure-JAX reference (for correctness check)
# ----------------------------------------------------------------------------
def _ref_gat_layer(h, w, a1, a2, adj, alpha, concat):
    wh = h @ w
    e = jax.nn.leaky_relu(wh @ a1 + (wh @ a2).T, negative_slope=alpha)
    e = jnp.where(adj > 0, e, -9e15)
    att = jax.nn.softmax(e, axis=1)
    hp = att @ wh
    return jax.nn.elu(hp) if concat else hp


def _ref_forward(x, params, adj, head_num, alpha):
    outs = []
    for head in params["heads"]:
        hx = x
        for (w, a1, a2) in head:
            hx = _ref_gat_layer(hx, w, a1, a2, adj, alpha, True)
        outs.append(hx)
    x = sum(outs) / head_num
    w, a1, a2 = params["out_att"]
    x = _ref_gat_layer(x, w, a1, a2, adj, alpha, False)
    return x @ params["lin_w"] + params["lin_b"]


# ----------------------------------------------------------------------------
# Parameter / input construction
# ----------------------------------------------------------------------------
def _xavier(key, shape):
    fan_in, fan_out = shape[0], shape[-1]
    lim = (6.0 / (fan_in + fan_out)) ** 0.5
    return jax.random.uniform(key, shape, jnp.float32, -lim, lim)


def make_params(key, channel_list, head_num):
    params = {"heads": []}
    n_layers = len(channel_list) - 2
    keys = jax.random.split(key, head_num * n_layers * 3 + 5)
    ki = 0
    for _ in range(head_num):
        layers = []
        for i in range(n_layers):
            fin, fout = channel_list[i], channel_list[i + 1]
            w = _xavier(keys[ki], (fin, fout)); ki += 1
            a1 = _xavier(keys[ki], (fout, 1)); ki += 1
            a2 = _xavier(keys[ki], (fout, 1)); ki += 1
            layers.append((w, a1, a2))
        params["heads"].append(layers)
    fin, fout = channel_list[-2], channel_list[-1]
    params["out_att"] = (
        _xavier(keys[ki], (fin, fout)),
        _xavier(keys[ki + 1], (fout, 1)),
        _xavier(keys[ki + 2], (fout, 1)),
    )
    ki += 3
    params["lin_w"] = _xavier(keys[ki], (fout, fout))            # (Fin, Fout) layout
    params["lin_b"] = jax.random.uniform(
        keys[ki + 1], (1, fout), jnp.float32, -0.1, 0.1)
    return params


if __name__ == "__main__":
    N = 16                       # number of graph nodes
    channel_list = [8, 16, 8]    # in -> hidden -> out
    head_num = 2
    alpha = 0.1

    root = jax.random.PRNGKey(0)
    k_x, k_adj, k_p = jax.random.split(root, 3)

    x = jax.random.normal(k_x, (N, channel_list[0]), jnp.float32)
    adj = (jax.random.uniform(k_adj, (N, N)) > 0.5).astype(jnp.float32)
    adj = jnp.maximum(adj, adj.T)
    adj = jnp.maximum(adj, jnp.eye(N, dtype=jnp.float32))

    params = make_params(k_p, channel_list, head_num)

    out = gat_forward(x, params, adj, head_num=head_num, alpha=alpha)
    out = jax.block_until_ready(out)

    ref = _ref_forward(x, params, adj, head_num, alpha)
    assert out.shape == (N, channel_list[-1])
    assert jnp.allclose(out, ref, atol=1e-4, rtol=1e-4), "mismatch vs reference"

    print("KERNEL_OK")
</pallas_src>

<mosaic_0001>
module attributes {stable_mosaic.version = 11 : i64} {
  func.func @_fused_gat_kernel(%arg0: memref<16x8xf32, #tpu.memory_space<vmem>>, %arg1: memref<16x16xbf16, #tpu.memory_space<vmem>>, %arg2: memref<8x32xf32, #tpu.memory_space<vmem>>, %arg3: memref<16x2xf32, #tpu.memory_space<vmem>>, %arg4: memref<16x2xf32, #tpu.memory_space<vmem>>, %arg5: memref<16x8xf32, #tpu.memory_space<vmem>>, %arg6: memref<8x2xf32, #tpu.memory_space<vmem>>, %arg7: memref<8x8xf32, #tpu.memory_space<vmem>>, %arg8: memref<1x8xf32, #tpu.memory_space<vmem>>, %arg9: memref<16x8xf32, #tpu.memory_space<vmem>>) attributes {dimension_semantics = [], scalar_prefetch = 0 : i64, scratch_operands = 0 : i64, tpu.core_type = #tpu.core_type<tc>} {
    %c0 = arith.constant 0 : index
    %c0_0 = arith.constant 0 : index
    %0 = vector.load %arg0[%c0, %c0_0] : memref<16x8xf32, #tpu.memory_space<vmem>>, vector<16x8xf32>
    %c0_1 = arith.constant 0 : index
    %c0_2 = arith.constant 0 : index
    %1 = vector.load %arg1[%c0_1, %c0_2] : memref<16x16xbf16, #tpu.memory_space<vmem>>, vector<16x16xbf16>
    %2 = arith.extf %1 : vector<16x16xbf16> to vector<16x16xf32>
    %c0_3 = arith.constant 0 : index
    %c0_4 = arith.constant 0 : index
    %3 = vector.load %arg2[%c0_3, %c0_4] : memref<8x32xf32, #tpu.memory_space<vmem>>, vector<8x32xf32>
    %cst = arith.constant dense<0.000000e+00> : vector<16x32xf32>
    %4 = tpu.matmul %0, %3, %cst {dimension_numbers = #tpu.dot_dimension_numbers<[1], [0], [0], [1], [0, 0, 1, 1], [], []>} : vector<16x8xf32>, vector<8x32xf32>, vector<16x32xf32> -> vector<16x32xf32>
    %5 = vector.extract_strided_slice %4 {offsets = [0, 0], sizes = [16, 16], strides = [1, 1]} : vector<16x32xf32> to vector<16x16xf32>
    %c0_5 = arith.constant 0 : index
    %c0_6 = arith.constant 0 : index
    %6 = vector.load %arg3[%c0_5, %c0_6] : memref<16x2xf32, #tpu.memory_space<vmem>>, vector<16x2xf32>
    %cst_7 = arith.constant dense<0.000000e+00> : vector<16x2xf32>
    %7 = tpu.matmul %5, %6, %cst_7 {dimension_numbers = #tpu.dot_dimension_numbers<[1], [0], [0], [1], [0, 0, 1, 1], [], []>} : vector<16x16xf32>, vector<16x2xf32>, vector<16x2xf32> -> vector<16x2xf32>
    %8 = vector.extract_strided_slice %7 {offsets = [0, 0], sizes = [16, 1], strides = [1, 1]} : vector<16x2xf32> to vector<16x1xf32>
    %9 = vector.extract_strided_slice %7 {offsets = [0, 1], sizes = [16, 1], strides = [1, 1]} : vector<16x2xf32> to vector<16x1xf32>
    %10 = tpu.transpose %9, [1, 0] : vector<16x1xf32> -> vector<1x16xf32>
    %11 = vector.broadcast %8 : vector<16x1xf32> to vector<16x16xf32>
    %12 = vector.broadcast %10 : vector<1x16xf32> to vector<16x16xf32>
    %13 = arith.addf %11, %12 : vector<16x16xf32>
    %cst_8 = arith.constant 0.000000e+00 : f32
    %14 = vector.broadcast %cst_8 : f32 to vector<16x16xf32>
    %15 = arith.cmpf ogt, %13, %14 : vector<16x16xf32>
    %cst_9 = arith.constant 1.000000e-01 : f32
    %16 = vector.broadcast %cst_9 : f32 to vector<16x16xf32>
    %17 = arith.mulf %16, %13 : vector<16x16xf32>
    %18 = arith.select %15, %13, %17 : vector<16x16xi1>, vector<16x16xf32>
    %19 = arith.addf %18, %2 : vector<16x16xf32>
    %cst_10 = arith.constant dense<0xFF800000> : vector<16xf32>
    %20 = vector.multi_reduction <maximumf>, %19, %cst_10 [1] : vector<16x16xf32> to vector<16xf32>
    %21 = vector.shape_cast %20 : vector<16xf32> to vector<16x1xf32>
    %22 = vector.broadcast %21 : vector<16x1xf32> to vector<16x16xf32>
    %23 = arith.subf %19, %22 : vector<16x16xf32>
    %24 = math.exp %23 : vector<16x16xf32>
    %cst_11 = arith.constant dense<0.000000e+00> : vector<16xf32>
    %25 = vector.multi_reduction <add>, %24, %cst_11 [1] : vector<16x16xf32> to vector<16xf32>
    %26 = vector.shape_cast %25 : vector<16xf32> to vector<16x1xf32>
    %27 = tpu.reciprocal %26 : vector<16x1xf32> -> vector<16x1xf32>
    %28 = vector.broadcast %27 : vector<16x1xf32> to vector<16x16xf32>
    %29 = arith.mulf %24, %28 : vector<16x16xf32>
    %cst_12 = arith.constant dense<0.000000e+00> : vector<16x16xf32>
    %30 = tpu.matmul %29, %5, %cst_12 {dimension_numbers = #tpu.dot_dimension_numbers<[1], [0], [0], [1], [0, 0, 1, 1], [], []>} : vector<16x16xf32>, vector<16x16xf32>, vector<16x16xf32> -> vector<16x16xf32>
    %cst_13 = arith.constant 0.000000e+00 : f32
    %31 = vector.broadcast %cst_13 : f32 to vector<16x16xf32>
    %32 = arith.cmpf ogt, %30, %31 : vector<16x16xf32>
    %cst_14 = arith.constant 0.000000e+00 : f32
    %33 = vector.broadcast %cst_14 : f32 to vector<16x16xf32>
    %34 = arith.minimumf %30, %33 : vector<16x16xf32>
    %35 = math.exp %34 : vector<16x16xf32>
    %cst_15 = arith.constant 1.000000e+00 : f32
    %36 = vector.broadcast %cst_15 : f32 to vector<16x16xf32>
    %37 = arith.subf %35, %36 : vector<16x16xf32>
    %38 = arith.select %32, %30, %37 : vector<16x16xi1>, vector<16x16xf32>
    %39 = vector.extract_strided_slice %4 {offsets = [0, 16], sizes = [16, 16], strides = [1, 1]} : vector<16x32xf32> to vector<16x16xf32>
    %c0_16 = arith.constant 0 : index
    %c0_17 = arith.constant 0 : index
    %40 = vector.load %arg4[%c0_16, %c0_17] : memref<16x2xf32, #tpu.memory_space<vmem>>, vector<16x2xf32>
    %cst_18 = arith.constant dense<0.000000e+00> : vector<16x2xf32>
    %41 = tpu.matmul %39, %40, %cst_18 {dimension_numbers = #tpu.dot_dimension_numbers<[1], [0], [0], [1], [0, 0, 1, 1], [], []>} : vector<16x16xf32>, vector<16x2xf32>, vector<16x2xf32> -> vector<16x2xf32>
    %42 = vector.extract_strided_slice %41 {offsets = [0, 0], sizes = [16, 1], strides = [1, 1]} : vector<16x2xf32> to vector<16x1xf32>
    %43 = vector.extract_strided_slice %41 {offsets = [0, 1], sizes = [16, 1], strides = [1, 1]} : vector<16x2xf32> to vector<16x1xf32>
    %44 = tpu.transpose %43, [1, 0] : vector<16x1xf32> -> vector<1x16xf32>
    %45 = vector.broadcast %42 : vector<16x1xf32> to vector<16x16xf32>
    %46 = vector.broadcast %44 : vector<1x16xf32> to vector<16x16xf32>
    %47 = arith.addf %45, %46 : vector<16x16xf32>
    %cst_19 = arith.constant 0.000000e+00 : f32
    %48 = vector.broadcast %cst_19 : f32 to vector<16x16xf32>
    %49 = arith.cmpf ogt, %47, %48 : vector<16x16xf32>
    %cst_20 = arith.constant 1.000000e-01 : f32
    %50 = vector.broadcast %cst_20 : f32 to vector<16x16xf32>
    %51 = arith.mulf %50, %47 : vector<16x16xf32>
    %52 = arith.select %49, %47, %51 : vector<16x16xi1>, vector<16x16xf32>
    %53 = arith.addf %52, %2 : vector<16x16xf32>
    %cst_21 = arith.constant dense<0xFF800000> : vector<16xf32>
    %54 = vector.multi_reduction <maximumf>, %53, %cst_21 [1] : vector<16x16xf32> to vector<16xf32>
    %55 = vector.shape_cast %54 : vector<16xf32> to vector<16x1xf32>
    %56 = vector.broadcast %55 : vector<16x1xf32> to vector<16x16xf32>
    %57 = arith.subf %53, %56 : vector<16x16xf32>
    %58 = math.exp %57 : vector<16x16xf32>
    %cst_22 = arith.constant dense<0.000000e+00> : vector<16xf32>
    %59 = vector.multi_reduction <add>, %58, %cst_22 [1] : vector<16x16xf32> to vector<16xf32>
    %60 = vector.shape_cast %59 : vector<16xf32> to vector<16x1xf32>
    %61 = tpu.reciprocal %60 : vector<16x1xf32> -> vector<16x1xf32>
    %62 = vector.broadcast %61 : vector<16x1xf32> to vector<16x16xf32>
    %63 = arith.mulf %58, %62 : vector<16x16xf32>
    %cst_23 = arith.constant dense<0.000000e+00> : vector<16x16xf32>
    %64 = tpu.matmul %63, %39, %cst_23 {dimension_numbers = #tpu.dot_dimension_numbers<[1], [0], [0], [1], [0, 0, 1, 1], [], []>} : vector<16x16xf32>, vector<16x16xf32>, vector<16x16xf32> -> vector<16x16xf32>
    %cst_24 = arith.constant 0.000000e+00 : f32
    %65 = vector.broadcast %cst_24 : f32 to vector<16x16xf32>
    %66 = arith.cmpf ogt, %64, %65 : vector<16x16xf32>
    %cst_25 = arith.constant 0.000000e+00 : f32
    %67 = vector.broadcast %cst_25 : f32 to vector<16x16xf32>
    %68 = arith.minimumf %64, %67 : vector<16x16xf32>
    %69 = math.exp %68 : vector<16x16xf32>
    %cst_26 = arith.constant 1.000000e+00 : f32
    %70 = vector.broadcast %cst_26 : f32 to vector<16x16xf32>
    %71 = arith.subf %69, %70 : vector<16x16xf32>
    %72 = arith.select %66, %64, %71 : vector<16x16xi1>, vector<16x16xf32>
    %73 = arith.addf %38, %72 : vector<16x16xf32>
    %cst_27 = arith.constant 5.000000e-01 : f32
    %74 = vector.broadcast %cst_27 : f32 to vector<16x16xf32>
    %75 = arith.mulf %73, %74 : vector<16x16xf32>
    %c0_28 = arith.constant 0 : index
    %c0_29 = arith.constant 0 : index
    %76 = vector.load %arg5[%c0_28, %c0_29] : memref<16x8xf32, #tpu.memory_space<vmem>>, vector<16x8xf32>
    %cst_30 = arith.constant dense<0.000000e+00> : vector<16x8xf32>
    %77 = tpu.matmul %75, %76, %cst_30 {dimension_numbers = #tpu.dot_dimension_numbers<[1], [0], [0], [1], [0, 0, 1, 1], [], []>} : vector<16x16xf32>, vector<16x8xf32>, vector<16x8xf32> -> vector<16x8xf32>
    %c0_31 = arith.constant 0 : index
    %c0_32 = arith.constant 0 : index
    %78 = vector.load %arg6[%c0_31, %c0_32] : memref<8x2xf32, #tpu.memory_space<vmem>>, vector<8x2xf32>
    %cst_33 = arith.constant dense<0.000000e+00> : vector<16x2xf32>
    %79 = tpu.matmul %77, %78, %cst_33 {dimension_numbers = #tpu.dot_dimension_numbers<[1], [0], [0], [1], [0, 0, 1, 1], [], []>} : vector<16x8xf32>, vector<8x2xf32>, vector<16x2xf32> -> vector<16x2xf32>
    %80 = vector.extract_strided_slice %79 {offsets = [0, 0], sizes = [16, 1], strides = [1, 1]} : vector<16x2xf32> to vector<16x1xf32>
    %81 = vector.extract_strided_slice %79 {offsets = [0, 1], sizes = [16, 1], strides = [1, 1]} : vector<16x2xf32> to vector<16x1xf32>
    %82 = tpu.transpose %81, [1, 0] : vector<16x1xf32> -> vector<1x16xf32>
    %83 = vector.broadcast %80 : vector<16x1xf32> to vector<16x16xf32>
    %84 = vector.broadcast %82 : vector<1x16xf32> to vector<16x16xf32>
    %85 = arith.addf %83, %84 : vector<16x16xf32>
    %cst_34 = arith.constant 0.000000e+00 : f32
    %86 = vector.broadcast %cst_34 : f32 to vector<16x16xf32>
    %87 = arith.cmpf ogt, %85, %86 : vector<16x16xf32>
    %cst_35 = arith.constant 1.000000e-01 : f32
    %88 = vector.broadcast %cst_35 : f32 to vector<16x16xf32>
    %89 = arith.mulf %88, %85 : vector<16x16xf32>
    %90 = arith.select %87, %85, %89 : vector<16x16xi1>, vector<16x16xf32>
    %91 = arith.addf %90, %2 : vector<16x16xf32>
    %cst_36 = arith.constant dense<0xFF800000> : vector<16xf32>
    %92 = vector.multi_reduction <maximumf>, %91, %cst_36 [1] : vector<16x16xf32> to vector<16xf32>
    %93 = vector.shape_cast %92 : vector<16xf32> to vector<16x1xf32>
    %94 = vector.broadcast %93 : vector<16x1xf32> to vector<16x16xf32>
    %95 = arith.subf %91, %94 : vector<16x16xf32>
    %96 = math.exp %95 : vector<16x16xf32>
    %cst_37 = arith.constant dense<0.000000e+00> : vector<16xf32>
    %97 = vector.multi_reduction <add>, %96, %cst_37 [1] : vector<16x16xf32> to vector<16xf32>
    %98 = vector.shape_cast %97 : vector<16xf32> to vector<16x1xf32>
    %99 = tpu.reciprocal %98 : vector<16x1xf32> -> vector<16x1xf32>
    %100 = vector.broadcast %99 : vector<16x1xf32> to vector<16x16xf32>
    %101 = arith.mulf %96, %100 : vector<16x16xf32>
    %cst_38 = arith.constant dense<0.000000e+00> : vector<16x8xf32>
    %102 = tpu.matmul %101, %77, %cst_38 {dimension_numbers = #tpu.dot_dimension_numbers<[1], [0], [0], [1], [0, 0, 1, 1], [], []>} : vector<16x16xf32>, vector<16x8xf32>, vector<16x8xf32> -> vector<16x8xf32>
    %c0_39 = arith.constant 0 : index
    %c0_40 = arith.constant 0 : index
    %103 = vector.load %arg7[%c0_39, %c0_40] : memref<8x8xf32, #tpu.memory_space<vmem>>, vector<8x8xf32>
    %cst_41 = arith.constant dense<0.000000e+00> : vector<16x8xf32>
    %104 = tpu.matmul %102, %103, %cst_41 {dimension_numbers = #tpu.dot_dimension_numbers<[1], [0], [0], [1], [0, 0, 1, 1], [], []>} : vector<16x8xf32>, vector<8x8xf32>, vector<16x8xf32> -> vector<16x8xf32>
    %c0_42 = arith.constant 0 : index
    %c0_43 = arith.constant 0 : index
    %105 = vector.load %arg8[%c0_42, %c0_43] : memref<1x8xf32, #tpu.memory_space<vmem>>, vector<1x8xf32>
    %106 = vector.broadcast %105 : vector<1x8xf32> to vector<16x8xf32>
    %107 = arith.addf %104, %106 : vector<16x8xf32>
    %c0_44 = arith.constant 0 : index
    %c0_45 = arith.constant 0 : index
    %108 = vector.load %arg9[%c0_44, %c0_45] : memref<16x8xf32, #tpu.memory_space<vmem>>, vector<16x8xf32>
    tpu.vector_store %arg9[%c0_44, %c0_45], %107 {strides = array<i32>} : memref<16x8xf32, #tpu.memory_space<vmem>>, vector<16x8xf32>,
    return
  }
}

</mosaic_0001>

<llo_original>
// kernel: tpu_custom_call.1
$region0: #{tpu_custom_call.1}
  #allocation0 [shape = 'u32[]', space=smem, size = 0x4, offset = 0x4, fixed_abs, tag = 'smem constant byte address 0x4 - core index']
  #allocation1 [shape = 'u32[144,128]{1,0:T(1,128)}', space=vmem, size = 0x12000, scoped, tag = 'internal scratch']
  %s0 = inlined_call_operand.vmem [shape: f32[16,8], index: 0, kind: input, shape index: {}]
  %s1 = inlined_call_operand.vmem [shape: bf16[16,16], index: 1, kind: input, shape index: {}]
  %s2 = inlined_call_operand.vmem [shape: f32[8,32], index: 2, kind: input, shape index: {}]
  %s3 = inlined_call_operand.vmem [shape: f32[16,2], index: 3, kind: input, shape index: {}]
  %s4 = inlined_call_operand.vmem [shape: f32[16,2], index: 4, kind: input, shape index: {}]
  %s5 = inlined_call_operand.vmem [shape: f32[16,8], index: 5, kind: input, shape index: {}]
  %s6 = inlined_call_operand.vmem [shape: f32[8,2], index: 6, kind: input, shape index: {}]
  %s7 = inlined_call_operand.vmem [shape: f32[8,8], index: 7, kind: input, shape index: {}]
  %s8 = inlined_call_operand.vmem [shape: f32[1,8], index: 8, kind: input, shape index: {}]
  %s9 = inlined_call_operand.vmem [shape: f32[16,8], index: 9, kind: output, shape index: {}]
  %s10 = sld [smem:[#allocation0]]
  $region46: #{tpu_custom_call.1} parent=0
    _
  %s12 = ssub.s32 1, %s10
  %s13 = scalar_select 0, %s12, %s10
  // Predicated region
  $region2: #{tpu_custom_call.1} parent=0 // pred_check
    _
  $region3: #{tpu_custom_call.1} parent=0 // pred_check_branch
    %15 = sbr.rel (0) target = $region5
  $region4: #{tpu_custom_call.1} parent=0 // pred_region
    _
  $region5: #{tpu_custom_call.1} parent=0 // pred_fallthru
    _
  // Predicated region
  $region6: #{tpu_custom_call.1} parent=0 // pred_check
    _
  $region7: #{tpu_custom_call.1} parent=0 // pred_check_branch
    %17 = sbr.rel (0) target = $region9
  $region8: #{tpu_custom_call.1} parent=0 // pred_region
    _
  $region9: #{tpu_custom_call.1} parent=0 // pred_fallthru
    _
  // Predicated region
  $region10: #{tpu_custom_call.1} parent=0 // pred_check
    _
  $region11: #{tpu_custom_call.1} parent=0 // pred_check_branch
    %19 = sbr.rel (0) target = $region13
  $region12: #{tpu_custom_call.1} parent=0 // pred_region
    _
  $region13: #{tpu_custom_call.1} parent=0 // pred_fallthru
    _
  // Predicated region
  $region14: #{tpu_custom_call.1} parent=0 // pred_check
    _
  $region15: #{tpu_custom_call.1} parent=0 // pred_check_branch
    %21 = sbr.rel (0) target = $region17
  $region16: #{tpu_custom_call.1} parent=0 // pred_region
    _
  $region17: #{tpu_custom_call.1} parent=0 // pred_fallthru
    _
  // Predicated region
  $region18: #{tpu_custom_call.1} parent=0 // pred_check
    _
  $region19: #{tpu_custom_call.1} parent=0 // pred_check_branch
    %23 = sbr.rel (0) target = $region21
  $region20: #{tpu_custom_call.1} parent=0 // pred_region
    _
  $region21: #{tpu_custom_call.1} parent=0 // pred_fallthru
    _
  // Predicated region
  $region22: #{tpu_custom_call.1} parent=0 // pred_check
    _
  $region23: #{tpu_custom_call.1} parent=0 // pred_check_branch
    %25 = sbr.rel (0) target = $region25
  $region24: #{tpu_custom_call.1} parent=0 // pred_region
    _
  $region25: #{tpu_custom_call.1} parent=0 // pred_fallthru
    _
  // Predicated region
  $region26: #{tpu_custom_call.1} parent=0 // pred_check
    _
  $region27: #{tpu_custom_call.1} parent=0 // pred_check_branch
    %27 = sbr.rel (0) target = $region29
  $region28: #{tpu_custom_call.1} parent=0 // pred_region
    _
  $region29: #{tpu_custom_call.1} parent=0 // pred_fallthru
    _
  // Predicated region
  $region30: #{tpu_custom_call.1} parent=0 // pred_check
    _
  $region31: #{tpu_custom_call.1} parent=0 // pred_check_branch
    %29 = sbr.rel (0) target = $region33
  $region32: #{tpu_custom_call.1} parent=0 // pred_region
    _
  $region33: #{tpu_custom_call.1} parent=0 // pred_fallthru
    _
  // Predicated region
  $region34: #{tpu_custom_call.1} parent=0 // pred_check
    _
  $region35: #{tpu_custom_call.1} parent=0 // pred_check_branch
    %31 = sbr.rel (0) target = $region37
  $region36: #{tpu_custom_call.1} parent=0 // pred_region
    _
  $region37: #{tpu_custom_call.1} parent=0 // pred_fallthru
    _
  %v32 = vld [vmem:[%s0] sm:$0xff]
  %v33 = vld [vmem:[%s0 + $0x8] sm:$0xff]
  %v34 = vld [vmem:[%s1] sm:$0xf]
  %v35 = vld [vmem:[%s1 + $0x4] sm:$0xf]
  %v36 = vunpack.c.l.bf16 %v34
  %v37 = vunpack.c.l.bf16 %v35
  %v38 = vld [vmem:[%s2] sm:$0xff]
  %vm39 = vcmask 64512
  %v41 = vsel %vm39, %v32, 0
  %v44 = vsel %vm39, %v33, 0
  %46 = vmatprep.subr.mxu0 0.0
  %47 = vmatpush1.msra.mxu0 %v38
  %48 = vmatprep.subr.mxu0 0.0
  %49 = vmatpush1.msra.mxu0 0.0
  %50 = vmatprep.subr.mxu0 0.0
  %51 = vmatpush1.msra.mxu0 0.0
  %52 = vmatprep.subr.mxu0 0.0
  %53 = vmatpush1.msra.mxu0 0.0
  %54 = vmatprep.subr.mxu0 0.0
  %55 = vmatpush1.msra.mxu0 0.0
  %56 = vmatprep.subr.mxu0 0.0
  %57 = vmatpush1.msra.mxu0 0.0
  %58 = vmatprep.subr.mxu0 0.0
  %59 = vmatpush1.msra.mxu0 0.0
  %60 = vmatprep.subr.mxu0 0.0
  %61 = vmatpush1.msra.mxu0 0.0
  %62 = vmatprep.subr.mxu0 0.0
  %63 = vmatpush1.msra.mxu0 0.0
  %64 = vmatprep.subr.mxu0 0.0
  %65 = vmatpush1.msra.mxu0 0.0
  %66 = vmatprep.subr.mxu0 0.0
  %67 = vmatpush1.msra.mxu0 0.0
  %68 = vmatprep.subr.mxu0 0.0
  %69 = vmatpush1.msra.mxu0 0.0
  %70 = vmatprep.subr.mxu0 0.0
  %71 = vmatpush1.msra.mxu0 0.0
  %72 = vmatprep.subr.mxu0 0.0
  %73 = vmatpush1.msra.mxu0 0.0
  %74 = vmatprep.subr.mxu0 0.0
  %75 = vmatpush1.msra.mxu0 0.0
  %76 = vmatprep.subr.mxu0 0.0
  %77 = vmatpush1.msra.mxu0 0.0
  %78 = vmatprep.subr.mxu0 0.0
  %79 = vmatpush1.msra.mxu0 0.0
  %80 = vmatprep.subr.mxu0 0.0
  %81 = vmatpush1.msra.mxu0 0.0
  %82 = vmatprep.subr.mxu0 0.0
  %83 = vmatpush1.msra.mxu0 0.0
  %84 = vmatprep.subr.mxu0 0.0
  %85 = vmatpush1.msra.mxu0 0.0
  %86 = vmatprep.subr.mxu0 0.0
  %87 = vmatpush1.msra.mxu0 0.0
  %88 = vmatprep.subr.mxu0 0.0
  %89 = vmatpush1.msra.mxu0 0.0
  %90 = vmatprep.subr.mxu0 0.0
  %91 = vmatpush1.msra.mxu0 0.0
  %92 = vmatprep.subr.mxu0 0.0
  %93 = vmatpush1.msra.mxu0 0.0
  %94 = vmatprep.subr.mxu0 0.0
  %95 = vmatpush1.msra.mxu0 0.0
  %96 = vmatprep.subr.mxu0 0.0
  %97 = vmatpush1.msra.mxu0 0.0
  %98 = vmatprep.subr.mxu0 0.0
  %99 = vmatpush1.msra.mxu0 0.0
  %100 = vmatprep.subr.mxu0 0.0
  %101 = vmatpush1.msra.mxu0 0.0
  %102 = vmatprep.subr.mxu0 0.0
  %103 = vmatpush1.msra.mxu0 0.0
  %104 = vmatprep.subr.mxu0 0.0
  %105 = vmatpush1.msra.mxu0 0.0
  %106 = vmatprep.subr.mxu0 0.0
  %107 = vmatpush1.msra.mxu0 0.0
  %108 = vmatprep.subr.mxu0 0.0
  %109 = vmatpush1.msra.mxu0 0.0
  %110 = vmatprep.mubr.f32.mxu0 0.0
  %111 = vmatmul.mubr.f32.gmra.mrb[0].mxu0 %v41
  %v112 = vpop.f32.mrb[0].mxu0
  %v113 = vadd.f32 0.0, %v112
  %v114 = vpop.f32.mrb[0].mxu0
  %115 = vmatprep.mubr.f32.mxu0 0.0
  %116 = vmatmul.mubr.f32.gmra.mrb[0].mxu0 %v44
  %v117 = vpop.f32.mrb[0].mxu0
  %v118 = vadd.f32 0.0, %v117
  %v119 = vpop.f32.mrb[0].mxu0
  %120 = vdwg.mxu0
  %v121 = vld [vmem:[%s3] sm:$0xff]
  %v122 = vld [vmem:[%s3 + $0x8] sm:$0xff]
  %vm123 = vcmask 130048
  %v125 = vsel %vm123, %v113, 0
  %v128 = vsel %vm123, %v118, 0
  %130 = vmatprep.subr.mxu0 0.0
  %131 = vmatpush1.msra.mxu0 %v121
  %132 = vmatprep.subr.mxu0 0.0
  %133 = vmatpush1.msra.mxu0 %v122
  %134 = vmatprep.subr.mxu0 0.0
  %135 = vmatpush1.msra.mxu0 0.0
  %136 = vmatprep.subr.mxu0 0.0
  %137 = vmatpush1.msra.mxu0 0.0
  %138 = vmatprep.subr.mxu0 0.0
  %139 = vmatpush1.msra.mxu0 0.0
  %140 = vmatprep.subr.mxu0 0.0
  %141 = vmatpush1.msra.mxu0 0.0
  %142 = vmatprep.subr.mxu0 0.0
  %143 = vmatpush1.msra.mxu0 0.0
  %144 = vmatprep.subr.mxu0 0.0
  %145 = vmatpush1.msra.mxu0 0.0
  %146 = vmatprep.subr.mxu0 0.0
  %147 = vmatpush1.msra.mxu0 0.0
  %148 = vmatprep.subr.mxu0 0.0
  %149 = vmatpush1.msra.mxu0 0.0
  %150 = vmatprep.subr.mxu0 0.0
  %151 = vmatpush1.msra.mxu0 0.0
  %152 = vmatprep.subr.mxu0 0.0
  %153 = vmatpush1.msra.mxu0 0.0
  %154 = vmatprep.subr.mxu0 0.0
  %155 = vmatpush1.msra.mxu0 0.0
  %156 = vmatprep.subr.mxu0 0.0
  %157 = vmatpush1.msra.mxu0 0.0
  %158 = vmatprep.subr.mxu0 0.0
  %159 = vmatpush1.msra.mxu0 0.0
  %160 = vmatprep.subr.mxu0 0.0
  %161 = vmatpush1.msra.mxu0 0.0
  %162 = vmatprep.subr.mxu0 0.0
  %163 = vmatpush1.msra.mxu0 0.0
  %164 = vmatprep.subr.mxu0 0.0
  %165 = vmatpush1.msra.mxu0 0.0
  %166 = vmatprep.subr.mxu0 0.0
  %167 = vmatpush1.msra.mxu0 0.0
  %168 = vmatprep.subr.mxu0 0.0
  %169 = vmatpush1.msra.mxu0 0.0
  %170 = vmatprep.subr.mxu0 0.0
  %171 = vmatpush1.msra.mxu0 0.0
  %172 = vmatprep.subr.mxu0 0.0
  %173 = vmatpush1.msra.mxu0 0.0
  %174 = vmatprep.subr.mxu0 0.0
  %175 = vmatpush1.msra.mxu0 0.0
  %176 = vmatprep.subr.mxu0 0.0
  %177 = vmatpush1.msra.mxu0 0.0
  %178 = vmatprep.subr.mxu0 0.0
  %179 = vmatpush1.msra.mxu0 0.0
  %180 = vmatprep.subr.mxu0 0.0
  %181 = vmatpush1.msra.mxu0 0.0
  %182 = vmatprep.subr.mxu0 0.0
  %183 = vmatpush1.msra.mxu0 0.0
  %184 = vmatprep.subr.mxu0 0.0
  %185 = vmatpush1.msra.mxu0 0.0
  %186 = vmatprep.subr.mxu0 0.0
  %187 = vmatpush1.msra.mxu0 0.0
  %188 = vmatprep.subr.mxu0 0.0
  %189 = vmatpush1.msra.mxu0 0.0
  %190 = vmatprep.subr.mxu0 0.0
  %191 = vmatpush1.msra.mxu0 0.0
  %192 = vmatprep.subr.mxu0 0.0
  %193 = vmatpush1.msra.mxu0 0.0
  %194 = vmatprep.mubr.f32.mxu0 0.0
  %195 = vmatmul.mubr.f32.gmra.mrb[0].mxu0 %v125
  %v196 = vpop.f32.mrb[0].mxu0
  %v197 = vadd.f32 0.0, %v196
  %v198 = vpop.f32.mrb[0].mxu0
  %199 = vmatprep.mubr.f32.mxu0 0.0
  %200 = vmatmul.mubr.f32.gmra.mrb[0].mxu0 %v128
  %v201 = vpop.f32.mrb[0].mxu0
  %v202 = vadd.f32 0.0, %v201
  %v203 = vpop.f32.mrb[0].mxu0
  %204 = vdwg.mxu0
  %207 = vrot.lane.b32.xlu0 %v197, 127
  %v208 = vpop.permute.xlu0 %207
  %209 = vrot.lane.b32.xlu0 %v202, 127
  %v210 = vpop.permute.xlu0 %209
  %213 = vxpose.xlu0.b32.start [1/16] %v208, 128
  %214 = vxpose.xlu0.b32.cont [2/16] %v210, 128
  %215 = vxpose.xlu0.b32.cont [3/16] 0.0, 128
  %216 = vxpose.xlu0.b32.cont [4/16] 0.0, 128
  %217 = vxpose.xlu0.b32.cont [5/16] 0.0, 128
  %218 = vxpose.xlu0.b32.cont [6/16] 0.0, 128
  %219 = vxpose.xlu0.b32.cont [7/16] 0.0, 128
  %220 = vxpose.xlu0.b32.cont [8/16] 0.0, 128
  %221 = vxpose.xlu0.b32.cont [9/16] 0.0, 128
  %222 = vxpose.xlu0.b32.cont [10/16] 0.0, 128
  %223 = vxpose.xlu0.b32.cont [11/16] 0.0, 128
  %224 = vxpose.xlu0.b32.cont [12/16] 0.0, 128
  %225 = vxpose.xlu0.b32.cont [13/16] 0.0, 128
  %226 = vxpose.xlu0.b32.cont [14/16] 0.0, 128
  %227 = vxpose.xlu0.b32.cont [15/16] 0.0, 128
  %228 = vxpose.xlu0.b32.end [16/16] 0.0, 128
  %v229 = vpop.trf.xlu0
  %v230 = vpop.trf.xlu0
  %v231 = vpop.trf.xlu0
  %v232 = vpop.trf.xlu0
  %v233 = vpop.trf.xlu0
  %v234 = vpop.trf.xlu0
  %v235 = vpop.trf.xlu0
  %v236 = vpop.trf.xlu0
  %v237 = vpop.trf.xlu0
  %v238 = vpop.trf.xlu0
  %v239 = vpop.trf.xlu0
  %v240 = vpop.trf.xlu0
  %v241 = vpop.trf.xlu0
  %v242 = vpop.trf.xlu0
  %v243 = vpop.trf.xlu0
  %v244 = vpop.trf.xlu0
  %245 = vset.pattern.permute.xlu0 0
  %246 = vperm.xlu0 %245, %v197
  %v247 = vpop.permute.xlu0 %246
  %249 = vset.pattern.permute.xlu0 0
  %250 = vperm.xlu0 %249, %v202
  %v251 = vpop.permute.xlu0 %250
  %v253 = vlaneseq
  %v254 = vshrl.u32 %v253, 7
  %v255 = vsub.s32 0, %v254
  %v256 = vrot.slane %v229, %v255
  %v257 = vadd.f32 %v247, %v256
  %v258 = vadd.f32 %v251, %v256
  %vm259 = vcmp.gt.f32.partialorder %v257, 0.0
  %vm260 = vcmp.gt.f32.partialorder %v258, 0.0
  %v261 = vmul.f32 %v257, 0.1
  %v262 = vmul.f32 %v258, 0.1
  %v263 = vsel %vm259, %v257, %v261
  %v264 = vsel %vm260, %v258, %v262
  %v265 = vadd.f32 %v263, %v36
  %v266 = vadd.f32 %v264, %v37
  %v267 = vsel %vm123, %v265, -inf
  %268 = vmax.xlane.f32.xlu0 %v267
  %v269 = vpop.xlane.xlu0 %268
  %v270 = vsel %vm123, %v266, -inf
  %271 = vmax.xlane.f32.xlu0 %v270
  %v272 = vpop.xlane.xlu0 %271
  %v273 = vsub.f32 %v265, %v269
  %v274 = vsub.f32 %v266, %v272
  %v275 = vmul.f32 %v273, 1.442695
  %v276 = vpow.pop %v275
  %v277 = vmul.f32 %v274, 1.442695
  %v278 = vpow.pop %v277
  %v279 = vsel %vm123, %v276, 0.0
  %280 = vadd.xlane.f32.xlu0 %v279
  %v281 = vpop.xlane.xlu0 %280
  %v282 = vsel %vm123, %v278, 0.0
  %283 = vadd.xlane.f32.xlu0 %v282
  %v284 = vpop.xlane.xlu0 %283
  %v285 = vrcp.pop %v281
  %v286 = vrcp.pop %v284
  %v287 = vmul.f32 %v276, %v285
  %v288 = vmul.f32 %v278, %v286
  %v290 = vsel %vm123, %v287, 0
  %v293 = vsel %vm123, %v288, 0
  %295 = vmatprep.subr.mxu0 0.0
  %296 = vmatpush1.msra.mxu0 %v113
  %297 = vmatprep.subr.mxu0 0.0
  %298 = vmatpush1.msra.mxu0 %v118
  %299 = vmatprep.subr.mxu0 0.0
  %300 = vmatpush1.msra.mxu0 0.0
  %301 = vmatprep.subr.mxu0 0.0
  %302 = vmatpush1.msra.mxu0 0.0
  %303 = vmatprep.subr.mxu0 0.0
  %304 = vmatpush1.msra.mxu0 0.0
  %305 = vmatprep.subr.mxu0 0.0
  %306 = vmatpush1.msra.mxu0 0.0
  %307 = vmatprep.subr.mxu0 0.0
  %308 = vmatpush1.msra.mxu0 0.0
  %309 = vmatprep.subr.mxu0 0.0
  %310 = vmatpush1.msra.mxu0 0.0
  %311 = vmatprep.subr.mxu0 0.0
  %312 = vmatpush1.msra.mxu0 0.0
  %313 = vmatprep.subr.mxu0 0.0
  %314 = vmatpush1.msra.mxu0 0.0
  %315 = vmatprep.subr.mxu0 0.0
  %316 = vmatpush1.msra.mxu0 0.0
  %317 = vmatprep.subr.mxu0 0.0
  %318 = vmatpush1.msra.mxu0 0.0
  %319 = vmatprep.subr.mxu0 0.0
  %320 = vmatpush1.msra.mxu0 0.0
  %321 = vmatprep.subr.mxu0 0.0
  %322 = vmatpush1.msra.mxu0 0.0
  %323 = vmatprep.subr.mxu0 0.0
  %324 = vmatpush1.msra.mxu0 0.0
  %325 = vmatprep.subr.mxu0 0.0
  %326 = vmatpush1.msra.mxu0 0.0
  %327 = vmatprep.subr.mxu0 0.0
  %328 = vmatpush1.msra.mxu0 0.0
  %329 = vmatprep.subr.mxu0 0.0
  %330 = vmatpush1.msra.mxu0 0.0
  %331 = vmatprep.subr.mxu0 0.0
  %332 = vmatpush1.msra.mxu0 0.0
  %333 = vmatprep.subr.mxu0 0.0
  %334 = vmatpush1.msra.mxu0 0.0
  %335 = vmatprep.subr.mxu0 0.0
  %336 = vmatpush1.msra.mxu0 0.0
  %337 = vmatprep.subr.mxu0 0.0
  %338 = vmatpush1.msra.mxu0 0.0
  %339 = vmatprep.subr.mxu0 0.0
  %340 = vmatpush1.msra.mxu0 0.0
  %341 = vmatprep.subr.mxu0 0.0
  %342 = vmatpush1.msra.mxu0 0.0
  %343 = vmatprep.subr.mxu0 0.0
  %344 = vmatpush1.msra.mxu0 0.0
  %345 = vmatprep.subr.mxu0 0.0
  %346 = vmatpush1.msra.mxu0 0.0
  %347 = vmatprep.subr.mxu0 0.0
  %348 = vmatpush1.msra.mxu0 0.0
  %349 = vmatprep.subr.mxu0 0.0
  %350 = vmatpush1.msra.mxu0 0.0
  %351 = vmatprep.subr.mxu0 0.0
  %352 = vmatpush1.msra.mxu0 0.0
  %353 = vmatprep.subr.mxu0 0.0
  %354 = vmatpush1.msra.mxu0 0.0
  %355 = vmatprep.subr.mxu0 0.0
  %356 = vmatpush1.msra.mxu0 0.0
  %357 = vmatprep.subr.mxu0 0.0
  %358 = vmatpush1.msra.mxu0 0.0
  %359 = vmatprep.mubr.f32.mxu0 0.0
  %360 = vmatmul.mubr.f32.gmra.mrb[0].mxu0 %v290
  %v361 = vpop.f32.mrb[0].mxu0
  %v362 = vadd.f32 0.0, %v361
  %v363 = vpop.f32.mrb[0].mxu0
  %364 = vmatprep.mubr.f32.mxu0 0.0
  %365 = vmatmul.mubr.f32.gmra.mrb[0].mxu0 %v293
  %v366 = vpop.f32.mrb[0].mxu0
  %v367 = vadd.f32 0.0, %v366
  %v368 = vpop.f32.mrb[0].mxu0
  %369 = vdwg.mxu0
  %vm370 = vcmp.gt.f32.partialorder %v362, 0.0
  %vm371 = vcmp.gt.f32.partialorder %v367, 0.0
  %v372 = vmin.f32 %v362, 0.0
  %v373 = vmin.f32 %v367, 0.0
  %v374 = vmul.f32 %v372, 1.442695
  %v375 = vpow.pop %v374
  %v376 = vmul.f32 %v373, 1.442695
  %v377 = vpow.pop %v376
  %v378 = vsub.f32 %v375, 1.0
  %v379 = vsub.f32 %v377, 1.0
  %v380 = vsel %vm370, %v362, %v378
  %v381 = vsel %vm371, %v367, %v379
  %v382 = vld [vmem:[%s4] sm:$0xff]
  %v383 = vld [vmem:[%s4 + $0x8] sm:$0xff]
  %384 = vrot.lane.b32.xlu0 %v113, 112
  %v385 = vpop.permute.xlu0 %384
  %386 = vrot.lane.b32.xlu0 %v118, 112
  %v387 = vpop.permute.xlu0 %386
  %v388 = vsel %vm123, %v385, 0
  %v390 = vsel %vm123, %v387, 0
  %392 = vmatprep.subr.mxu0 0.0
  %393 = vmatpush1.msra.mxu0 %v382
  %394 = vmatprep.subr.mxu0 0.0
  %395 = vmatpush1.msra.mxu0 %v383
  %396 = vmatprep.subr.mxu0 0.0
  %397 = vmatpush1.msra.mxu0 0.0
  %398 = vmatprep.subr.mxu0 0.0
  %399 = vmatpush1.msra.mxu0 0.0
  %400 = vmatprep.subr.mxu0 0.0
  %401 = vmatpush1.msra.mxu0 0.0
  %402 = vmatprep.subr.mxu0 0.0
  %403 = vmatpush1.msra.mxu0 0.0
  %404 = vmatprep.subr.mxu0 0.0
  %405 = vmatpush1.msra.mxu0 0.0
  %406 = vmatprep.subr.mxu0 0.0
  %407 = vmatpush1.msra.mxu0 0.0
  %408 = vmatprep.subr.mxu0 0.0
  %409 = vmatpush1.msra.mxu0 0.0
  %410 = vmatprep.subr.mxu0 0.0
  %411 = vmatpush1.msra.mxu0 0.0
  %412 = vmatprep.subr.mxu0 0.0
  %413 = vmatpush1.msra.mxu0 0.0
  %414 = vmatprep.subr.mxu0 0.0
  %415 = vmatpush1.msra.mxu0 0.0
  %416 = vmatprep.subr.mxu0 0.0
  %417 = vmatpush1.msra.mxu0 0.0
  %418 = vmatprep.subr.mxu0 0.0
  %419 = vmatpush1.msra.mxu0 0.0
  %420 = vmatprep.subr.mxu0 0.0
  %421 = vmatpush1.msra.mxu0 0.0
  %422 = vmatprep.subr.mxu0 0.0
  %423 = vmatpush1.msra.mxu0 0.0
  %424 = vmatprep.subr.mxu0 0.0
  %425 = vmatpush1.msra.mxu0 0.0
  %426 = vmatprep.subr.mxu0 0.0
  %427 = vmatpush1.msra.mxu0 0.0
  %428 = vmatprep.subr.mxu0 0.0
  %429 = vmatpush1.msra.mxu0 0.0
  %430 = vmatprep.subr.mxu0 0.0
  %431 = vmatpush1.msra.mxu0 0.0
  %432 = vmatprep.subr.mxu0 0.0
  %433 = vmatpush1.msra.mxu0 0.0
  %434 = vmatprep.subr.mxu0 0.0
  %435 = vmatpush1.msra.mxu0 0.0
  %436 = vmatprep.subr.mxu0 0.0
  %437 = vmatpush1.msra.mxu0 0.0
  %438 = vmatprep.subr.mxu0 0.0
  %439 = vmatpush1.msra.mxu0 0.0
  %440 = vmatprep.subr.mxu0 0.0
  %441 = vmatpush1.msra.mxu0 0.0
  %442 = vmatprep.subr.mxu0 0.0
  %443 = vmatpush1.msra.mxu0 0.0
  %444 = vmatprep.subr.mxu0 0.0
  %445 = vmatpush1.msra.mxu0 0.0
  %446 = vmatprep.subr.mxu0 0.0
  %447 = vmatpush1.msra.mxu0 0.0
  %448 = vmatprep.subr.mxu0 0.0
  %449 = vmatpush1.msra.mxu0 0.0
  %450 = vmatprep.subr.mxu0 0.0
  %451 = vmatpush1.msra.mxu0 0.0
  %452 = vmatprep.subr.mxu0 0.0
  %453 = vmatpush1.msra.mxu0 0.0
  %454 = vmatprep.subr.mxu0 0.0
  %455 = vmatpush1.msra.mxu0 0.0
  %456 = vmatprep.mubr.f32.mxu0 0.0
  %457 = vmatmul.mubr.f32.gmra.mrb[0].mxu0 %v388
  %v458 = vpop.f32.mrb[0].mxu0
  %v459 = vadd.f32 0.0, %v458
  %v460 = vpop.f32.mrb[0].mxu0
  %461 = vmatprep.mubr.f32.mxu0 0.0
  %462 = vmatmul.mubr.f32.gmra.mrb[0].mxu0 %v390
  %v463 = vpop.f32.mrb[0].mxu0
  %v464 = vadd.f32 0.0, %v463
  %v465 = vpop.f32.mrb[0].mxu0
  %466 = vdwg.mxu0
  %469 = vrot.lane.b32.xlu0 %v459, 127
  %v470 = vpop.permute.xlu0 %469
  %471 = vrot.lane.b32.xlu0 %v464, 127
  %v472 = vpop.permute.xlu0 %471
  %475 = vxpose.xlu0.b32.start [1/16] %v470, 128
  %476 = vxpose.xlu0.b32.cont [2/16] %v472, 128
  %477 = vxpose.xlu0.b32.cont [3/16] 0.0, 128
  %478 = vxpose.xlu0.b32.cont [4/16] 0.0, 128
  %479 = vxpose.xlu0.b32.cont [5/16] 0.0, 128
  %480 = vxpose.xlu0.b32.cont [6/16] 0.0, 128
  %481 = vxpose.xlu0.b32.cont [7/16] 0.0, 128
  %482 = vxpose.xlu0.b32.cont [8/16] 0.0, 128
  %483 = vxpose.xlu0.b32.cont [9/16] 0.0, 128
  %484 = vxpose.xlu0.b32.cont [10/16] 0.0, 128
  %485 = vxpose.xlu0.b32.cont [11/16] 0.0, 128
  %486 = vxpose.xlu0.b32.cont [12/16] 0.0, 128
  %487 = vxpose.xlu0.b32.cont [13/16] 0.0, 128
  %488 = vxpose.xlu0.b32.cont [14/16] 0.0, 128
  %489 = vxpose.xlu0.b32.cont [15/16] 0.0, 128
  %490 = vxpose.xlu0.b32.end [16/16] 0.0, 128
  %v491 = vpop.trf.xlu0
  %v492 = vpop.trf.xlu0
  %v493 = vpop.trf.xlu0
  %v494 = vpop.trf.xlu0
  %v495 = vpop.trf.xlu0
  %v496 = vpop.trf.xlu0
  %v497 = vpop.trf.xlu0
  %v498 = vpop.trf.xlu0
  %v499 = vpop.trf.xlu0
  %v500 = vpop.trf.xlu0
  %v501 = vpop.trf.xlu0
  %v502 = vpop.trf.xlu0
  %v503 = vpop.trf.xlu0
  %v504 = vpop.trf.xlu0
  %v505 = vpop.trf.xlu0
  %v506 = vpop.trf.xlu0
  %507 = vset.pattern.permute.xlu0 0
  %508 = vperm.xlu0 %507, %v459
  %v509 = vpop.permute.xlu0 %508
  %511 = vset.pattern.permute.xlu0 0
  %512 = vperm.xlu0 %511, %v464
  %v513 = vpop.permute.xlu0 %512
  %v515 = vlaneseq
  %v516 = vshrl.u32 %v515, 7
  %v517 = vsub.s32 0, %v516
  %v518 = vrot.slane %v491, %v517
  %v519 = vadd.f32 %v509, %v518
  %v520 = vadd.f32 %v513, %v518
  %vm521 = vcmp.gt.f32.partialorder %v519, 0.0
  %vm522 = vcmp.gt.f32.partialorder %v520, 0.0
  %v523 = vmul.f32 %v519, 0.1
  %v524 = vmul.f32 %v520, 0.1
  %v525 = vsel %vm521, %v519, %v523
  %v526 = vsel %vm522, %v520, %v524
  %v527 = vadd.f32 %v525, %v36
  %v528 = vadd.f32 %v526, %v37
  %v529 = vsel %vm123, %v527, -inf
  %530 = vmax.xlane.f32.xlu0 %v529
  %v531 = vpop.xlane.xlu0 %530
  %v532 = vsel %vm123, %v528, -inf
  %533 = vmax.xlane.f32.xlu0 %v532
  %v534 = vpop.xlane.xlu0 %533
  %v535 = vsub.f32 %v527, %v531
  %v536 = vsub.f32 %v528, %v534
  %v537 = vmul.f32 %v535, 1.442695
  %v538 = vpow.pop %v537
  %v539 = vmul.f32 %v536, 1.442695
  %v540 = vpow.pop %v539
  %v541 = vsel %vm123, %v538, 0.0
  %542 = vadd.xlane.f32.xlu0 %v541
  %v543 = vpop.xlane.xlu0 %542
  %v544 = vsel %vm123, %v540, 0.0
  %545 = vadd.xlane.f32.xlu0 %v544
  %v546 = vpop.xlane.xlu0 %545
  %v547 = vrcp.pop %v543
  %v548 = vrcp.pop %v546
  %v549 = vmul.f32 %v538, %v547
  %v550 = vmul.f32 %v540, %v548
  %v554 = vsel %vm123, %v549, 0
  %v557 = vsel %vm123, %v550, 0
  %559 = vmatprep.subr.mxu0 0.0
  %560 = vmatpush1.msra.mxu0 %v385
  %561 = vmatprep.subr.mxu0 0.0
  %562 = vmatpush1.msra.mxu0 %v387
  %563 = vmatprep.subr.mxu0 0.0
  %564 = vmatpush1.msra.mxu0 0.0
  %565 = vmatprep.subr.mxu0 0.0
  %566 = vmatpush1.msra.mxu0 0.0
  %567 = vmatprep.subr.mxu0 0.0
  %568 = vmatpush1.msra.mxu0 0.0
  %569 = vmatprep.subr.mxu0 0.0
  %570 = vmatpush1.msra.mxu0 0.0
  %571 = vmatprep.subr.mxu0 0.0
  %572 = vmatpush1.msra.mxu0 0.0
  %573 = vmatprep.subr.mxu0 0.0
  %574 = vmatpush1.msra.mxu0 0.0
  %575 = vmatprep.subr.mxu0 0.0
  %576 = vmatpush1.msra.mxu0 0.0
  %577 = vmatprep.subr.mxu0 0.0
  %578 = vmatpush1.msra.mxu0 0.0
  %579 = vmatprep.subr.mxu0 0.0
  %580 = vmatpush1.msra.mxu0 0.0
  %581 = vmatprep.subr.mxu0 0.0
  %582 = vmatpush1.msra.mxu0 0.0
  %583 = vmatprep.subr.mxu0 0.0
  %584 = vmatpush1.msra.mxu0 0.0
  %585 = vmatprep.subr.mxu0 0.0
  %586 = vmatpush1.msra.mxu0 0.0
  %587 = vmatprep.subr.mxu0 0.0
  %588 = vmatpush1.msra.mxu0 0.0
  %589 = vmatprep.subr.mxu0 0.0
  %590 = vmatpush1.msra.mxu0 0.0
  %591 = vmatprep.subr.mxu0 0.0
  %592 = vmatpush1.msra.mxu0 0.0
  %593 = vmatprep.subr.mxu0 0.0
  %594 = vmatpush1.msra.mxu0 0.0
  %595 = vmatprep.subr.mxu0 0.0
  %596 = vmatpush1.msra.mxu0 0.0
  %597 = vmatprep.subr.mxu0 0.0
  %598 = vmatpush1.msra.mxu0 0.0
  %599 = vmatprep.subr.mxu0 0.0
  %600 = vmatpush1.msra.mxu0 0.0
  %601 = vmatprep.subr.mxu0 0.0
  %602 = vmatpush1.msra.mxu0 0.0
  %603 = vmatprep.subr.mxu0 0.0
  %604 = vmatpush1.msra.mxu0 0.0
  %605 = vmatprep.subr.mxu0 0.0
  %606 = vmatpush1.msra.mxu0 0.0
  %607 = vmatprep.subr.mxu0 0.0
  %608 = vmatpush1.msra.mxu0 0.0
  %609 = vmatprep.subr.mxu0 0.0
  %610 = vmatpush1.msra.mxu0 0.0
  %611 = vmatprep.subr.mxu0 0.0
  %612 = vmatpush1.msra.mxu0 0.0
  %613 = vmatprep.subr.mxu0 0.0
  %614 = vmatpush1.msra.mxu0 0.0
  %615 = vmatprep.subr.mxu0 0.0
  %616 = vmatpush1.msra.mxu0 0.0
  %617 = vmatprep.subr.mxu0 0.0
  %618 = vmatpush1.msra.mxu0 0.0
  %619 = vmatprep.subr.mxu0 0.0
  %620 = vmatpush1.msra.mxu0 0.0
  %621 = vmatprep.subr.mxu0 0.0
  %622 = vmatpush1.msra.mxu0 0.0
  %623 = vmatprep.mubr.f32.mxu0 0.0
  %624 = vmatmul.mubr.f32.gmra.mrb[0].mxu0 %v554
  %v625 = vpop.f32.mrb[0].mxu0
  %v626 = vadd.f32 0.0, %v625
  %v627 = vpop.f32.mrb[0].mxu0
  %628 = vmatprep.mubr.f32.mxu0 0.0
  %629 = vmatmul.mubr.f32.gmra.mrb[0].mxu0 %v557
  %v630 = vpop.f32.mrb[0].mxu0
  %v631 = vadd.f32 0.0, %v630
  %v632 = vpop.f32.mrb[0].mxu0
  %633 = vdwg.mxu0
  %vm634 = vcmp.gt.f32.partialorder %v626, 0.0
  %vm635 = vcmp.gt.f32.partialorder %v631, 0.0
  %v636 = vmin.f32 %v626, 0.0
  %v637 = vmin.f32 %v631, 0.0
  %v638 = vmul.f32 %v636, 1.442695
  %v639 = vpow.pop %v638
  %v640 = vmul.f32 %v637, 1.442695
  %v641 = vpow.pop %v640
  %v642 = vsub.f32 %v639, 1.0
  %v643 = vsub.f32 %v641, 1.0
  %v644 = vsel %vm634, %v626, %v642
  %v645 = vsel %vm635, %v631, %v643
  %v646 = vadd.f32 %v380, %v644
  %v647 = vadd.f32 %v381, %v645
  %v648 = vmul.f32 %v646, 0.5
  %v649 = vmul.f32 %v647, 0.5
  %v650 = vld [vmem:[%s5] sm:$0xff]
  %v651 = vld [vmem:[%s5 + $0x8] sm:$0xff]
  %v653 = vsel %vm123, %v648, 0
  %v656 = vsel %vm123, %v649, 0
  %658 = vmatprep.subr.mxu0 0.0
  %659 = vmatpush1.msra.mxu0 %v650
  %660 = vmatprep.subr.mxu0 0.0
  %661 = vmatpush1.msra.mxu0 %v651
  %662 = vmatprep.subr.mxu0 0.0
  %663 = vmatpush1.msra.mxu0 0.0
  %664 = vmatprep.subr.mxu0 0.0
  %665 = vmatpush1.msra.mxu0 0.0
  %666 = vmatprep.subr.mxu0 0.0
  %667 = vmatpush1.msra.mxu0 0.0
  %668 = vmatprep.subr.mxu0 0.0
  %669 = vmatpush1.msra.mxu0 0.0
  %670 = vmatprep.subr.mxu0 0.0
  %671 = vmatpush1.msra.mxu0 0.0
  %672 = vmatprep.subr.mxu0 0.0
  %673 = vmatpush1.msra.mxu0 0.0
  %674 = vmatprep.subr.mxu0 0.0
  %675 = vmatpush1.msra.mxu0 0.0
  %676 = vmatprep.subr.mxu0 0.0
  %677 = vmatpush1.msra.mxu0 0.0
  %678 = vmatprep.subr.mxu0 0.0
  %679 = vmatpush1.msra.mxu0 0.0
  %680 = vmatprep.subr.mxu0 0.0
  %681 = vmatpush1.msra.mxu0 0.0
  %682 = vmatprep.subr.mxu0 0.0
  %683 = vmatpush1.msra.mxu0 0.0
  %684 = vmatprep.subr.mxu0 0.0
  %685 = vmatpush1.msra.mxu0 0.0
  %686 = vmatprep.subr.mxu0 0.0
  %687 = vmatpush1.msra.mxu0 0.0
  %688 = vmatprep.subr.mxu0 0.0
  %689 = vmatpush1.msra.mxu0 0.0
  %690 = vmatprep.subr.mxu0 0.0
  %691 = vmatpush1.msra.mxu0 0.0
  %692 = vmatprep.subr.mxu0 0.0
  %693 = vmatpush1.msra.mxu0 0.0
  %694 = vmatprep.subr.mxu0 0.0
  %695 = vmatpush1.msra.mxu0 0.0
  %696 = vmatprep.subr.mxu0 0.0
  %697 = vmatpush1.msra.mxu0 0.0
  %698 = vmatprep.subr.mxu0 0.0
  %699 = vmatpush1.msra.mxu0 0.0
  %700 = vmatprep.subr.mxu0 0.0
  %701 = vmatpush1.msra.mxu0 0.0
  %702 = vmatprep.subr.mxu0 0.0
  %703 = vmatpush1.msra.mxu0 0.0
  %704 = vmatprep.subr.mxu0 0.0
  %705 = vmatpush1.msra.mxu0 0.0
  %706 = vmatprep.subr.mxu0 0.0
  %707 = vmatpush1.msra.mxu0 0.0
  %708 = vmatprep.subr.mxu0 0.0
  %709 = vmatpush1.msra.mxu0 0.0
  %710 = vmatprep.subr.mxu0 0.0
  %711 = vmatpush1.msra.mxu0 0.0
  %712 = vmatprep.subr.mxu0 0.0
  %713 = vmatpush1.msra.mxu0 0.0
  %714 = vmatprep.subr.mxu0 0.0
  %715 = vmatpush1.msra.mxu0 0.0
  %716 = vmatprep.subr.mxu0 0.0
  %717 = vmatpush1.msra.mxu0 0.0
  %718 = vmatprep.subr.mxu0 0.0
  %719 = vmatpush1.msra.mxu0 0.0
  %720 = vmatprep.subr.mxu0 0.0
  %721 = vmatpush1.msra.mxu0 0.0
  %722 = vmatprep.mubr.f32.mxu0 0.0
  %723 = vmatmul.mubr.f32.gmra.mrb[0].mxu0 %v653
  %v724 = vpop.f32.mrb[0].mxu0
  %v725 = vadd.f32 0.0, %v724
  %v726 = vpop.f32.mrb[0].mxu0
  %727 = vmatprep.mubr.f32.mxu0 0.0
  %728 = vmatmul.mubr.f32.gmra.mrb[0].mxu0 %v656
  %v729 = vpop.f32.mrb[0].mxu0
  %v730 = vadd.f32 0.0, %v729
  %v731 = vpop.f32.mrb[0].mxu0
  %732 = vdwg.mxu0
  %v733 = vld [vmem:[%s6] sm:$0xff]
  %v735 = vsel %vm39, %v725, 0
  %v738 = vsel %vm39, %v730, 0
  %740 = vmatprep.subr.mxu0 0.0
  %741 = vmatpush1.msra.mxu0 %v733
  %742 = vmatprep.subr.mxu0 0.0
  %743 = vmatpush1.msra.mxu0 0.0
  %744 = vmatprep.subr.mxu0 0.0
  %745 = vmatpush1.msra.mxu0 0.0
  %746 = vmatprep.subr.mxu0 0.0
  %747 = vmatpush1.msra.mxu0 0.0
  %748 = vmatprep.subr.mxu0 0.0
  %749 = vmatpush1.msra.mxu0 0.0
  %750 = vmatprep.subr.mxu0 0.0
  %751 = vmatpush1.msra.mxu0 0.0
  %752 = vmatprep.subr.mxu0 0.0
  %753 = vmatpush1.msra.mxu0 0.0
  %754 = vmatprep.subr.mxu0 0.0
  %755 = vmatpush1.msra.mxu0 0.0
  %756 = vmatprep.subr.mxu0 0.0
  %757 = vmatpush1.msra.mxu0 0.0
  %758 = vmatprep.subr.mxu0 0.0
  %759 = vmatpush1.msra.mxu0 0.0
  %760 = vmatprep.subr.mxu0 0.0
  %761 = vmatpush1.msra.mxu0 0.0
  %762 = vmatprep.subr.mxu0 0.0
  %763 = vmatpush1.msra.mxu0 0.0
  %764 = vmatprep.subr.mxu0 0.0
  %765 = vmatpush1.msra.mxu0 0.0
  %766 = vmatprep.subr.mxu0 0.0
  %767 = vmatpush1.msra.mxu0 0.0
  %768 = vmatprep.subr.mxu0 0.0
  %769 = vmatpush1.msra.mxu0 0.0
  %770 = vmatprep.subr.mxu0 0.0
  %771 = vmatpush1.msra.mxu0 0.0
  %772 = vmatprep.subr.mxu0 0.0
  %773 = vmatpush1.msra.mxu0 0.0
  %774 = vmatprep.subr.mxu0 0.0
  %775 = vmatpush1.msra.mxu0 0.0
  %776 = vmatprep.subr.mxu0 0.0
  %777 = vmatpush1.msra.mxu0 0.0
  %778 = vmatprep.subr.mxu0 0.0
  %779 = vmatpush1.msra.mxu0 0.0
  %780 = vmatprep.subr.mxu0 0.0
  %781 = vmatpush1.msra.mxu0 0.0
  %782 = vmatprep.subr.mxu0 0.0
  %783 = vmatpush1.msra.mxu0 0.0
  %784 = vmatprep.subr.mxu0 0.0
  %785 = vmatpush1.msra.mxu0 0.0
  %786 = vmatprep.subr.mxu0 0.0
  %787 = vmatpush1.msra.mxu0 0.0
  %788 = vmatprep.subr.mxu0 0.0
  %789 = vmatpush1.msra.mxu0 0.0
  %790 = vmatprep.subr.mxu0 0.0
  %791 = vmatpush1.msra.mxu0 0.0
  %792 = vmatprep.subr.mxu0 0.0
  %793 = vmatpush1.msra.mxu0 0.0
  %794 = vmatprep.subr.mxu0 0.0
  %795 = vmatpush1.msra.mxu0 0.0
  %796 = vmatprep.subr.mxu0 0.0
  %797 = vmatpush1.msra.mxu0 0.0
  %798 = vmatprep.subr.mxu0 0.0
  %799 = vmatpush1.msra.mxu0 0.0
  %800 = vmatprep.subr.mxu0 0.0
  %801 = vmatpush1.msra.mxu0 0.0
  %802 = vmatprep.subr.mxu0 0.0
  %803 = vmatpush1.msra.mxu0 0.0
  %804 = vmatprep.mubr.f32.mxu0 0.0
  %805 = vmatmul.mubr.f32.gmra.mrb[0].mxu0 %v735
  %v806 = vpop.f32.mrb[0].mxu0
  %v807 = vadd.f32 0.0, %v806
  %v808 = vpop.f32.mrb[0].mxu0
  %809 = vmatprep.mubr.f32.mxu0 0.0
  %810 = vmatmul.mubr.f32.gmra.mrb[0].mxu0 %v738
  %v811 = vpop.f32.mrb[0].mxu0
  %v812 = vadd.f32 0.0, %v811
  %v813 = vpop.f32.mrb[0].mxu0
  %814 = vdwg.mxu0
  %817 = vrot.lane.b32.xlu0 %v807, 127
  %v818 = vpop.permute.xlu0 %817
  %819 = vrot.lane.b32.xlu0 %v812, 127
  %v820 = vpop.permute.xlu0 %819
  %823 = vxpose.xlu0.b32.start [1/16] %v818, 128
  %824 = vxpose.xlu0.b32.cont [2/16] %v820, 128
  %825 = vxpose.xlu0.b32.cont [3/16] 0.0, 128
  %826 = vxpose.xlu0.b32.cont [4/16] 0.0, 128
  %827 = vxpose.xlu0.b32.cont [5/16] 0.0, 128
  %828 = vxpose.xlu0.b32.cont [6/16] 0.0, 128
  %829 = vxpose.xlu0.b32.cont [7/16] 0.0, 128
  %830 = vxpose.xlu0.b32.cont [8/16] 0.0, 128
  %831 = vxpose.xlu0.b32.cont [9/16] 0.0, 128
  %832 = vxpose.xlu0.b32.cont [10/16] 0.0, 128
  %833 = vxpose.xlu0.b32.cont [11/16] 0.0, 128
  %834 = vxpose.xlu0.b32.cont [12/16] 0.0, 128
  %835 = vxpose.xlu0.b32.cont [13/16] 0.0, 128
  %836 = vxpose.xlu0.b32.cont [14/16] 0.0, 128
  %837 = vxpose.xlu0.b32.cont [15/16] 0.0, 128
  %838 = vxpose.xlu0.b32.end [16/16] 0.0, 128
  %v839 = vpop.trf.xlu0
  %v840 = vpop.trf.xlu0
  %v841 = vpop.trf.xlu0
  %v842 = vpop.trf.xlu0
  %v843 = vpop.trf.xlu0
  %v844 = vpop.trf.xlu0
  %v845 = vpop.trf.xlu0
  %v846 = vpop.trf.xlu0
  %v847 = vpop.trf.xlu0
  %v848 = vpop.trf.xlu0
  %v849 = vpop.trf.xlu0
  %v850 = vpop.trf.xlu0
  %v851 = vpop.trf.xlu0
  %v852 = vpop.trf.xlu0
  %v853 = vpop.trf.xlu0
  %v854 = vpop.trf.xlu0
  %855 = vset.pattern.permute.xlu0 0
  %856 = vperm.xlu0 %855, %v807
  %v857 = vpop.permute.xlu0 %856
  %859 = vset.pattern.permute.xlu0 0
  %860 = vperm.xlu0 %859, %v812
  %v861 = vpop.permute.xlu0 %860
  %v863 = vlaneseq
  %v864 = vshrl.u32 %v863, 7
  %v865 = vsub.s32 0, %v864
  %v866 = vrot.slane %v839, %v865
  %v867 = vadd.f32 %v857, %v866
  %v868 = vadd.f32 %v861, %v866
  %vm869 = vcmp.gt.f32.partialorder %v867, 0.0
  %vm870 = vcmp.gt.f32.partialorder %v868, 0.0
  %v871 = vmul.f32 %v867, 0.1
  %v872 = vmul.f32 %v868, 0.1
  %v873 = vsel %vm869, %v867, %v871
  %v874 = vsel %vm870, %v868, %v872
  %v875 = vadd.f32 %v873, %v36
  %v876 = vadd.f32 %v874, %v37
  %v877 = vsel %vm123, %v875, -inf
  %878 = vmax.xlane.f32.xlu0 %v877
  %v879 = vpop.xlane.xlu0 %878
  %v880 = vsel %vm123, %v876, -inf
  %881 = vmax.xlane.f32.xlu0 %v880
  %v882 = vpop.xlane.xlu0 %881
  %v883 = vsub.f32 %v875, %v879
  %v884 = vsub.f32 %v876, %v882
  %v885 = vmul.f32 %v883, 1.442695
  %v886 = vpow.pop %v885
  %v887 = vmul.f32 %v884, 1.442695
  %v888 = vpow.pop %v887
  %v889 = vsel %vm123, %v886, 0.0
  %890 = vadd.xlane.f32.xlu0 %v889
  %v891 = vpop.xlane.xlu0 %890
  %v892 = vsel %vm123, %v888, 0.0
  %893 = vadd.xlane.f32.xlu0 %v892
  %v894 = vpop.xlane.xlu0 %893
  %v895 = vrcp.pop %v891
  %v896 = vrcp.pop %v894
  %v897 = vmul.f32 %v886, %v895
  %v898 = vmul.f32 %v888, %v896
  %v900 = vsel %vm123, %v897, 0
  %v903 = vsel %vm123, %v898, 0
  %905 = vmatprep.subr.mxu0 0.0
  %906 = vmatpush1.msra.mxu0 %v725
  %907 = vmatprep.subr.mxu0 0.0
  %908 = vmatpush1.msra.mxu0 %v730
  %909 = vmatprep.subr.mxu0 0.0
  %910 = vmatpush1.msra.mxu0 0.0
  %911 = vmatprep.subr.mxu0 0.0
  %912 = vmatpush1.msra.mxu0 0.0
  %913 = vmatprep.subr.mxu0 0.0
  %914 = vmatpush1.msra.mxu0 0.0
  %915 = vmatprep.subr.mxu0 0.0
  %916 = vmatpush1.msra.mxu0 0.0
  %917 = vmatprep.subr.mxu0 0.0
  %918 = vmatpush1.msra.mxu0 0.0
  %919 = vmatprep.subr.mxu0 0.0
  %920 = vmatpush1.msra.mxu0 0.0
  %921 = vmatprep.subr.mxu0 0.0
  %922 = vmatpush1.msra.mxu0 0.0
  %923 = vmatprep.subr.mxu0 0.0
  %924 = vmatpush1.msra.mxu0 0.0
  %925 = vmatprep.subr.mxu0 0.0
  %926 = vmatpush1.msra.mxu0 0.0
  %927 = vmatprep.subr.mxu0 0.0
  %928 = vmatpush1.msra.mxu0 0.0
  %929 = vmatprep.subr.mxu0 0.0
  %930 = vmatpush1.msra.mxu0 0.0
  %931 = vmatprep.subr.mxu0 0.0
  %932 = vmatpush1.msra.mxu0 0.0
  %933 = vmatprep.subr.mxu0 0.0
  %934 = vmatpush1.msra.mxu0 0.0
  %935 = vmatprep.subr.mxu0 0.0
  %936 = vmatpush1.msra.mxu0 0.0
  %937 = vmatprep.subr.mxu0 0.0
  %938 = vmatpush1.msra.mxu0 0.0
  %939 = vmatprep.subr.mxu0 0.0
  %940 = vmatpush1.msra.mxu0 0.0
  %941 = vmatprep.subr.mxu0 0.0
  %942 = vmatpush1.msra.mxu0 0.0
  %943 = vmatprep.subr.mxu0 0.0
  %944 = vmatpush1.msra.mxu0 0.0
  %945 = vmatprep.subr.mxu0 0.0
  %946 = vmatpush1.msra.mxu0 0.0
  %947 = vmatprep.subr.mxu0 0.0
  %948 = vmatpush1.msra.mxu0 0.0
  %949 = vmatprep.subr.mxu0 0.0
  %950 = vmatpush1.msra.mxu0 0.0
  %951 = vmatprep.subr.mxu0 0.0
  %952 = vmatpush1.msra.mxu0 0.0
  %953 = vmatprep.subr.mxu0 0.0
  %954 = vmatpush1.msra.mxu0 0.0
  %955 = vmatprep.subr.mxu0 0.0
  %956 = vmatpush1.msra.mxu0 0.0
  %957 = vmatprep.subr.mxu0 0.0
  %958 = vmatpush1.msra.mxu0 0.0
  %959 = vmatprep.subr.mxu0 0.0
  %960 = vmatpush1.msra.mxu0 0.0
  %961 = vmatprep.subr.mxu0 0.0
  %962 = vmatpush1.msra.mxu0 0.0
  %963 = vmatprep.subr.mxu0 0.0
  %964 = vmatpush1.msra.mxu0 0.0
  %965 = vmatprep.subr.mxu0 0.0
  %966 = vmatpush1.msra.mxu0 0.0
  %967 = vmatprep.subr.mxu0 0.0
  %968 = vmatpush1.msra.mxu0 0.0
  %969 = vmatprep.mubr.f32.mxu0 0.0
  %970 = vmatmul.mubr.f32.gmra.mrb[0].mxu0 %v900
  %v971 = vpop.f32.mrb[0].mxu0
  %v972 = vadd.f32 0.0, %v971
  %v973 = vpop.f32.mrb[0].mxu0
  %974 = vmatprep.mubr.f32.mxu0 0.0
  %975 = vmatmul.mubr.f32.gmra.mrb[0].mxu0 %v903
  %v976 = vpop.f32.mrb[0].mxu0
  %v977 = vadd.f32 0.0, %v976
  %v978 = vpop.f32.mrb[0].mxu0
  %979 = vdwg.mxu0
  %v980 = vld [vmem:[%s7] sm:$0xff]
  %v981 = vld [vmem:[%s8] sm:$0x1]
  %v983 = vlaneseq
  %v984 = vshrl.u32 %v983, 7
  %v985 = vsub.s32 0, %v984
  %v986 = vrot.slane %v981, %v985
  %v989 = vsel %vm39, %v972, 0
  %v992 = vsel %vm39, %v977, 0
  %994 = vmatprep.subr.mxu0 0.0
  %995 = vmatpush1.msra.mxu0 %v980
  %996 = vmatprep.subr.mxu0 0.0
  %997 = vmatpush1.msra.mxu0 0.0
  %998 = vmatprep.subr.mxu0 0.0
  %999 = vmatpush1.msra.mxu0 0.0
  %1000 = vmatprep.subr.mxu0 0.0
  %1001 = vmatpush1.msra.mxu0 0.0
  %1002 = vmatprep.subr.mxu0 0.0
  %1003 = vmatpush1.msra.mxu0 0.0
  %1004 = vmatprep.subr.mxu0 0.0
  %1005 = vmatpush1.msra.mxu0 0.0
  %1006 = vmatprep.subr.mxu0 0.0
  %1007 = vmatpush1.msra.mxu0 0.0
  %1008 = vmatprep.subr.mxu0 0.0
  %1009 = vmatpush1.msra.mxu0 0.0
  %1010 = vmatprep.subr.mxu0 0.0
  %1011 = vmatpush1.msra.mxu0 0.0
  %1012 = vmatprep.subr.mxu0 0.0
  %1013 = vmatpush1.msra.mxu0 0.0
  %1014 = vmatprep.subr.mxu0 0.0
  %1015 = vmatpush1.msra.mxu0 0.0
  %1016 = vmatprep.subr.mxu0 0.0
  %1017 = vmatpush1.msra.mxu0 0.0
  %1018 = vmatprep.subr.mxu0 0.0
  %1019 = vmatpush1.msra.mxu0 0.0
  %1020 = vmatprep.subr.mxu0 0.0
  %1021 = vmatpush1.msra.mxu0 0.0
  %1022 = vmatprep.subr.mxu0 0.0
  %1023 = vmatpush1.msra.mxu0 0.0
  %1024 = vmatprep.subr.mxu0 0.0
  %1025 = vmatpush1.msra.mxu0 0.0
  %1026 = vmatprep.subr.mxu0 0.0
  %1027 = vmatpush1.msra.mxu0 0.0
  %1028 = vmatprep.subr.mxu0 0.0
  %1029 = vmatpush1.msra.mxu0 0.0
  %1030 = vmatprep.subr.mxu0 0.0
  %1031 = vmatpush1.msra.mxu0 0.0
  %1032 = vmatprep.subr.mxu0 0.0
  %1033 = vmatpush1.msra.mxu0 0.0
  %1034 = vmatprep.subr.mxu0 0.0
  %1035 = vmatpush1.msra.mxu0 0.0
  %1036 = vmatprep.subr.mxu0 0.0
  %1037 = vmatpush1.msra.mxu0 0.0
  %1038 = vmatprep.subr.mxu0 0.0
  %1039 = vmatpush1.msra.mxu0 0.0
  %1040 = vmatprep.subr.mxu0 0.0
  %1041 = vmatpush1.msra.mxu0 0.0
  %1042 = vmatprep.subr.mxu0 0.0
  %1043 = vmatpush1.msra.mxu0 0.0
  %1044 = vmatprep.subr.mxu0 0.0
  %1045 = vmatpush1.msra.mxu0 0.0
  %1046 = vmatprep.subr.mxu0 0.0
  %1047 = vmatpush1.msra.mxu0 0.0
  %1048 = vmatprep.subr.mxu0 0.0
  %1049 = vmatpush1.msra.mxu0 0.0
  %1050 = vmatprep.subr.mxu0 0.0
  %1051 = vmatpush1.msra.mxu0 0.0
  %1052 = vmatprep.subr.mxu0 0.0
  %1053 = vmatpush1.msra.mxu0 0.0
  %1054 = vmatprep.subr.mxu0 0.0
  %1055 = vmatpush1.msra.mxu0 0.0
  %1056 = vmatprep.subr.mxu0 0.0
  %1057 = vmatpush1.msra.mxu0 0.0
  %1058 = vmatprep.mubr.f32.mxu0 0.0
  %1059 = vmatmul.mubr.f32.gmra.mrb[0].mxu0 %v989
  %v1060 = vpop.f32.mrb[0].mxu0
  %v1061 = vadd.f32 %v986, %v1060
  %v1062 = vpop.f32.mrb[0].mxu0
  %1063 = vmatprep.mubr.f32.mxu0 0.0
  %1064 = vmatmul.mubr.f32.gmra.mrb[0].mxu0 %v992
  %v1065 = vpop.f32.mrb[0].mxu0
  %v1066 = vadd.f32 %v986, %v1065
  %v1067 = vpop.f32.mrb[0].mxu0
  %1068 = vdwg.mxu0
  %1069 = vst.msk [vmem:[%s9] sm:$0xff] %vm39, %v1061
  %1070 = vst.msk [vmem:[%s9 + $0x8] sm:$0xff] %vm39, %v1066
  // Predicated region
  $region38: #{tpu_custom_call.1} parent=0 // pred_check
    _
  $region39: #{tpu_custom_call.1} parent=0 // pred_check_branch
    %1072 = sbr.rel (0) target = $region41
  $region40: #{tpu_custom_call.1} parent=0 // pred_region
    _
  $region41: #{tpu_custom_call.1} parent=0 // pred_fallthru
    _
  // Predicated region
  $region42: #{tpu_custom_call.1} parent=0 // pred_check
    _
  $region43: #{tpu_custom_call.1} parent=0 // pred_check_branch
    %1074 = sbr.rel (0) target = $region45
  $region44: #{tpu_custom_call.1} parent=0 // pred_region
    _
  $region45: #{tpu_custom_call.1} parent=0 // pred_fallthru
    _

</llo_original>
